<compile_context>
chip_gen: v6e
topology: v6e:2x2x1
jax: 0.10.0
libtpu: 0.0.40
codegen_flags: <defaults>
</compile_context>

<pallas_src>
import jax
import jax.numpy as jnp
from jax.experimental import pallas as pl
from jax.experimental.pallas import tpu as pltpu

LANE = 128       # minimal unmasked-vst width for the output class dim
MAX_PACK = 128   # cap G*N at one MXU tile (v5e width; safe on v6e/v7x)


def _round_up(x, m):
    return (x + m - 1) // m * m


def gnn_kernel(adj_ref, x_ref, w1_ref, b1_ref, w2_ref, b2_ref, o_ref):
    """One group of graphs per grid step; all operands VMEM-resident.

    adj_ref: f32 [GN, GN] block-diagonal normalized adjacency
    x_ref:   bf16 [GN, Fin]
    w1_ref:  bf16 [Fin, H],  b1_ref: f32 [1, H]
    w2_ref:  bf16 [H, out_p], b2_ref: f32 [1, out_p] (padded lanes = -1e30)
    o_ref:   f32 [GN, out_p]
    """
    adj = adj_ref[...]

    # ---- Layer 1: h = relu(Ahat @ (x @ W1) + b1) ----
    xw = jnp.dot(x_ref[...], w1_ref[...], preferred_element_type=jnp.float32)
    h = jnp.dot(adj, xw, preferred_element_type=jnp.float32)
    h = jnp.maximum(h + b1_ref[...], 0.0)

    # ---- Layer 2: z = Ahat @ (h @ W2) + b2 (class dim padded to 128 lanes) ----
    hw = jnp.dot(h.astype(jnp.bfloat16), w2_ref[...],
                 preferred_element_type=jnp.float32)
    z = jnp.dot(adj, hw, preferred_element_type=jnp.float32) + b2_ref[...]

    # ---- log_softmax over lanes (f32 epilogue).  Padded lanes carry -1e30
    #      from the bias, so exp underflows to 0 and no explicit mask is needed.
    m = jnp.max(z, axis=-1, keepdims=True)
    s = z - m
    lse = jnp.log(jnp.sum(jnp.exp(s), axis=-1, keepdims=True))
    o_ref[...] = s - lse


def gnn_forward(adj_hat, x, w1, b1, w2, b2):
    """Batched 2-layer GCN forward.

    adj_hat: [B, N, N] normalized adjacency (f32), x: [B, N, Fin]; parameters
    are shared across the batch.  Single-graph inputs ([N, N], [N, Fin]) are
    also accepted.  Returns [B, N, out_dim] (or [N, out_dim]) log-probs.
    """
    squeeze = adj_hat.ndim == 2
    if squeeze:
        adj_hat, x = adj_hat[None], x[None]

    B, N, _ = adj_hat.shape
    fin = x.shape[-1]
    hid = w1.shape[1]
    out_dim = w2.shape[1]
    out_p = _round_up(out_dim, LANE)   # 128, not wider (no gain from 256)

    # Pack graphs into groups whose block-diagonal Ahat fits one MXU tile.
    G = max(1, min(B, MAX_PACK // N)) if N <= MAX_PACK else 1
    ng = -(-B // G)
    pad_b = ng * G - B
    if pad_b:
        adj_hat = jnp.pad(adj_hat, ((0, pad_b), (0, 0), (0, 0)))
        x = jnp.pad(x, ((0, pad_b), (0, 0), (0, 0)))
    BN = G * N

    # Block-diagonal adjacency per group (f32: accurate aggregation, no
    # serialized casts between the two MXU pushes of a layer).
    adj_g = adj_hat.reshape(ng, G, N, N).astype(jnp.float32)
    eye_g = jnp.eye(G, dtype=jnp.float32)
    adj_bd = jnp.einsum('gimn,ij->gimjn', adj_g, eye_g).reshape(ng, BN, BN)

    # Flattened bf16 features / weights (f32 accumulation inside the kernel).
    x_flat = x.reshape(ng, BN, fin).astype(jnp.bfloat16)
    w1_16 = w1.astype(jnp.bfloat16)
    w2_16 = jnp.pad(w2, ((0, 0), (0, out_p - out_dim))).astype(jnp.bfloat16)
    b1r = b1.reshape(1, hid).astype(jnp.float32)
    # Pad b2 with -1e30: folds the log_softmax lane mask into the bias add.
    b2p = jnp.pad(b2.reshape(1, out_dim).astype(jnp.float32),
                  ((0, 0), (0, out_p - out_dim)), constant_values=-1e30)

    flops = 2 * ng * (BN * fin * hid + BN * BN * hid
                      + BN * hid * out_p + BN * BN * out_p)
    bytes_accessed = (ng * BN * BN * 4 + ng * BN * fin * 2
                      + fin * hid * 2 + hid * 4 + hid * out_p * 2 + out_p * 4
                      + ng * BN * out_p * 4)
    cost = pl.CostEstimate(flops=flops,
                           transcendentals=ng * BN * (out_p + 1),
                           bytes_accessed=bytes_accessed)

    out = pl.pallas_call(
        gnn_kernel,
        out_shape=jax.ShapeDtypeStruct((ng, BN, out_p), jnp.float32),
        grid=(ng,),
        in_specs=[
            pl.BlockSpec((None, BN, BN), lambda g: (g, 0, 0)),    # adj (group)
            pl.BlockSpec((None, BN, fin), lambda g: (g, 0, 0)),   # x   (group)
            pl.BlockSpec((fin, hid), lambda g: (0, 0)),           # W1 (shared)
            pl.BlockSpec((1, hid), lambda g: (0, 0)),             # b1
            pl.BlockSpec((hid, out_p), lambda g: (0, 0)),         # W2 (padded)
            pl.BlockSpec((1, out_p), lambda g: (0, 0)),           # b2 (padded)
        ],
        out_specs=pl.BlockSpec((None, BN, out_p), lambda g: (g, 0, 0)),
        compiler_params=pltpu.CompilerParams(
            # Groups are independent -> shard across TensorCores on v7x.
            # Default VMEM budget is fine: live VMEM here is <100 KB.  When N
            # is tiled for real graphs, re-derive tile sizes against 64 MiB
            # physical VMEM on v7x (128 MiB on v5e/v6e).
            dimension_semantics=("parallel",)),
        cost_estimate=cost,
    )(adj_bd, x_flat, w1_16, b1r, w2_16, b2p)

    out = out.reshape(ng * G, N, out_p)[:B, :, :out_dim]
    return out[0] if squeeze else out


def build_normalized_adjacency(edge_index, num_nodes):
    """Ahat = D^{-1/2}(A + I_remaining)D^{-1/2}, matching PyG gcn_norm:
    duplicate edges counted with multiplicity (scatter-add); a weight-1
    self-loop is added only to nodes that do not already have one."""
    src, dst = edge_index[0], edge_index[1]
    a = jnp.zeros((num_nodes, num_nodes), jnp.float32).at[dst, src].add(1.0)
    eye = jnp.eye(num_nodes, dtype=jnp.float32)
    has_loop = jnp.sum(a * eye, axis=1) > 0
    a = a + eye * jnp.where(has_loop, 0.0, 1.0)[:, None]
    deg = jnp.sum(a, axis=1)
    d = jnp.where(deg > 0, jax.lax.rsqrt(deg), 0.0)
    return d[:, None] * a * d[None, :]


def glorot(key, shape):
    fan_in, fan_out = shape
    limit = jnp.sqrt(6.0 / (fan_in + fan_out))
    return jax.random.uniform(key, shape, jnp.float32, -limit, limit)


def reference_forward(adj_hat, x, w1, b1, w2, b2):
    h = jnp.maximum(adj_hat @ (x @ w1) + b1, 0.0)
    z = adj_hat @ (h @ w2) + b2
    return jax.nn.log_softmax(z, axis=-1)


if __name__ == "__main__":
    key = jax.random.PRNGKey(0)
    k_edges, k_x, k_w1, k_w2 = jax.random.split(key, 4)

    # Small problem: 4 graphs x 16 nodes, 8 in-features, 32 hidden, 8 classes.
    batch = 4
    num_nodes = 16
    input_dim = 8
    hidden_dim = 32
    output_dim = 8
    num_edges = 40

    # Deterministic random edge lists [B, 2, E] and node features [B, N, Fin].
    edge_index = jax.random.randint(k_edges, (batch, 2, num_edges), 0, num_nodes)
    x = jax.random.normal(k_x, (batch, num_nodes, input_dim), jnp.float32)

    # GCNConv-shaped parameters (glorot weights, zero biases), shared per batch.
    w1 = glorot(k_w1, (input_dim, hidden_dim))
    b1 = jnp.zeros((1, hidden_dim), jnp.float32)
    w2 = glorot(k_w2, (hidden_dim, output_dim))
    b2 = jnp.zeros((1, output_dim), jnp.float32)

    # Vectorized adjacency build (no per-graph host loop).
    adj_hat = jax.vmap(lambda ei: build_normalized_adjacency(ei, num_nodes))(
        edge_index)

    out = gnn_forward(adj_hat, x, w1, b1, w2, b2)
    out = jax.block_until_ready(out)
    assert out.shape == (batch, num_nodes, output_dim)

    # f32 reference; kernel uses bf16 features/weights -> slightly looser tol.
    ref = jax.vmap(lambda a, xx: reference_forward(a, xx, w1, b1, w2, b2))(
        adj_hat, x)
    assert jnp.allclose(out, ref, atol=3e-2, rtol=3e-2), "mismatch vs reference"
    # Rows must be valid log-probabilities.
    assert jnp.allclose(jnp.sum(jnp.exp(out), axis=-1), 1.0, atol=1e-3)

    print("KERNEL_OK")
</pallas_src>

<mosaic_0001>
module attributes {stable_mosaic.version = 11 : i64} {
  func.func @gnn_kernel(%arg0: i32, %arg1: memref<1x64x64xf32, #tpu.memory_space<vmem>>, %arg2: memref<1x64x8xbf16, #tpu.memory_space<vmem>>, %arg3: memref<8x32xbf16, #tpu.memory_space<vmem>>, %arg4: memref<1x32xf32, #tpu.memory_space<vmem>>, %arg5: memref<32x128xbf16, #tpu.memory_space<vmem>>, %arg6: memref<1x128xf32, #tpu.memory_space<vmem>>, %arg7: memref<1x64x128xf32, #tpu.memory_space<vmem>>) attributes {dimension_semantics = [#tpu.dimension_semantics<parallel>], iteration_bounds = array<i64: 1>, scalar_prefetch = 0 : i64, scratch_operands = 0 : i64, tpu.core_type = #tpu.core_type<tc>, window_params = [{transform_indices = @transform_0, window_bounds = array<i64: 1, 64, 64>}, {transform_indices = @transform_1, window_bounds = array<i64: 1, 64, 8>}, {pipeline_mode = #tpu.pipeline_mode<synchronous>, transform_indices = @transform_2, window_bounds = array<i64: 8, 32>}, {pipeline_mode = #tpu.pipeline_mode<synchronous>, transform_indices = @transform_3, window_bounds = array<i64: 1, 32>}, {pipeline_mode = #tpu.pipeline_mode<synchronous>, transform_indices = @transform_4, window_bounds = array<i64: 32, 128>}, {pipeline_mode = #tpu.pipeline_mode<synchronous>, transform_indices = @transform_5, window_bounds = array<i64: 1, 128>}, {transform_indices = @transform_6, window_bounds = array<i64: 1, 64, 128>}]} {
    %c0 = arith.constant 0 : index
    %c0_0 = arith.constant 0 : index
    %c0_1 = arith.constant 0 : index
    %0 = vector.load %arg1[%c0, %c0_0, %c0_1] : memref<1x64x64xf32, #tpu.memory_space<vmem>>, vector<1x64x64xf32>
    %1 = vector.shape_cast %0 : vector<1x64x64xf32> to vector<64x64xf32>
    %c0_2 = arith.constant 0 : index
    %c0_3 = arith.constant 0 : index
    %c0_4 = arith.constant 0 : index
    %2 = vector.load %arg2[%c0_2, %c0_3, %c0_4] : memref<1x64x8xbf16, #tpu.memory_space<vmem>>, vector<1x64x8xbf16>
    %3 = vector.shape_cast %2 : vector<1x64x8xbf16> to vector<64x8xbf16>
    %c0_5 = arith.constant 0 : index
    %c0_6 = arith.constant 0 : index
    %4 = vector.load %arg3[%c0_5, %c0_6] : memref<8x32xbf16, #tpu.memory_space<vmem>>, vector<8x32xbf16>
    %cst = arith.constant dense<0.000000e+00> : vector<64x32xf32>
    %5 = tpu.matmul %3, %4, %cst {dimension_numbers = #tpu.dot_dimension_numbers<[1], [0], [0], [1], [0, 0, 1, 1], [], []>} : vector<64x8xbf16>, vector<8x32xbf16>, vector<64x32xf32> -> vector<64x32xf32>
    %cst_7 = arith.constant dense<0.000000e+00> : vector<64x32xf32>
    %6 = tpu.matmul %1, %5, %cst_7 {dimension_numbers = #tpu.dot_dimension_numbers<[1], [0], [0], [1], [0, 0, 1, 1], [], []>} : vector<64x64xf32>, vector<64x32xf32>, vector<64x32xf32> -> vector<64x32xf32>
    %c0_8 = arith.constant 0 : index
    %c0_9 = arith.constant 0 : index
    %7 = vector.load %arg4[%c0_8, %c0_9] : memref<1x32xf32, #tpu.memory_space<vmem>>, vector<1x32xf32>
    %8 = vector.broadcast %7 : vector<1x32xf32> to vector<64x32xf32>
    %9 = arith.addf %6, %8 : vector<64x32xf32>
    %cst_10 = arith.constant 0.000000e+00 : f32
    %10 = vector.broadcast %cst_10 : f32 to vector<64x32xf32>
    %11 = arith.maximumf %9, %10 : vector<64x32xf32>
    %12 = arith.truncf %11 : vector<64x32xf32> to vector<64x32xbf16>
    %c0_11 = arith.constant 0 : index
    %c0_12 = arith.constant 0 : index
    %13 = vector.load %arg5[%c0_11, %c0_12] : memref<32x128xbf16, #tpu.memory_space<vmem>>, vector<32x128xbf16>
    %cst_13 = arith.constant dense<0.000000e+00> : vector<64x128xf32>
    %14 = tpu.matmul %12, %13, %cst_13 {dimension_numbers = #tpu.dot_dimension_numbers<[1], [0], [0], [1], [0, 0, 1, 1], [], []>} : vector<64x32xbf16>, vector<32x128xbf16>, vector<64x128xf32> -> vector<64x128xf32>
    %cst_14 = arith.constant dense<0.000000e+00> : vector<64x128xf32>
    %15 = tpu.matmul %1, %14, %cst_14 {dimension_numbers = #tpu.dot_dimension_numbers<[1], [0], [0], [1], [0, 0, 1, 1], [], []>} : vector<64x64xf32>, vector<64x128xf32>, vector<64x128xf32> -> vector<64x128xf32>
    %c0_15 = arith.constant 0 : index
    %c0_16 = arith.constant 0 : index
    %16 = vector.load %arg6[%c0_15, %c0_16] : memref<1x128xf32, #tpu.memory_space<vmem>>, vector<1x128xf32>
    %17 = vector.broadcast %16 : vector<1x128xf32> to vector<64x128xf32>
    %18 = arith.addf %15, %17 : vector<64x128xf32>
    %cst_17 = arith.constant dense<0xFF800000> : vector<64xf32>
    %19 = vector.multi_reduction <maximumf>, %18, %cst_17 [1] : vector<64x128xf32> to vector<64xf32>
    %20 = vector.shape_cast %19 : vector<64xf32> to vector<64x1xf32>
    %21 = vector.broadcast %20 : vector<64x1xf32> to vector<64x128xf32>
    %22 = arith.subf %18, %21 : vector<64x128xf32>
    %23 = math.exp %22 : vector<64x128xf32>
    %cst_18 = arith.constant dense<0.000000e+00> : vector<64xf32>
    %24 = vector.multi_reduction <add>, %23, %cst_18 [1] : vector<64x128xf32> to vector<64xf32>
    %25 = vector.shape_cast %24 : vector<64xf32> to vector<64x1xf32>
    %26 = math.log %25 : vector<64x1xf32>
    %27 = vector.broadcast %26 : vector<64x1xf32> to vector<64x128xf32>
    %28 = arith.subf %22, %27 : vector<64x128xf32>
    %c0_19 = arith.constant 0 : index
    %c0_20 = arith.constant 0 : index
    %c0_21 = arith.constant 0 : index
    %29 = vector.load %arg7[%c0_19, %c0_20, %c0_21] : memref<1x64x128xf32, #tpu.memory_space<vmem>>, vector<1x64x128xf32>
    %30 = vector.shape_cast %29 : vector<1x64x128xf32> to vector<64x128xf32>
    %31 = vector.shape_cast %28 : vector<64x128xf32> to vector<1x64x128xf32>
    tpu.vector_store %arg7[%c0_19, %c0_20, %c0_21], %31 {strides = array<i32>} : memref<1x64x128xf32, #tpu.memory_space<vmem>>, vector<1x64x128xf32>,
    return
  }
  func.func @transform_0(%arg0: i32) -> (i32, i32, i32) {
    %c0_i32 = arith.constant 0 : i32
    %c0_i32_0 = arith.constant 0 : i32
    %c0_i32_1 = arith.constant 0 : i32
    return %arg0, %c0_i32, %c0_i32_0 : i32, i32, i32
  }
  func.func @transform_1(%arg0: i32) -> (i32, i32, i32) {
    %c0_i32 = arith.constant 0 : i32
    %c0_i32_0 = arith.constant 0 : i32
    %c0_i32_1 = arith.constant 0 : i32
    return %arg0, %c0_i32, %c0_i32_0 : i32, i32, i32
  }
  func.func @transform_2(%arg0: i32) -> (i32, i32) {
    %c0_i32 = arith.constant 0 : i32
    %c0_i32_0 = arith.constant 0 : i32
    %c0_i32_1 = arith.constant 0 : i32
    return %c0_i32, %c0_i32_0 : i32, i32
  }
  func.func @transform_3(%arg0: i32) -> (i32, i32) {
    %c0_i32 = arith.constant 0 : i32
    %c0_i32_0 = arith.constant 0 : i32
    %c0_i32_1 = arith.constant 0 : i32
    return %c0_i32, %c0_i32_0 : i32, i32
  }
  func.func @transform_4(%arg0: i32) -> (i32, i32) {
    %c0_i32 = arith.constant 0 : i32
    %c0_i32_0 = arith.constant 0 : i32
    %c0_i32_1 = arith.constant 0 : i32
    return %c0_i32, %c0_i32_0 : i32, i32
  }
  func.func @transform_5(%arg0: i32) -> (i32, i32) {
    %c0_i32 = arith.constant 0 : i32
    %c0_i32_0 = arith.constant 0 : i32
    %c0_i32_1 = arith.constant 0 : i32
    return %c0_i32, %c0_i32_0 : i32, i32
  }
  func.func @transform_6(%arg0: i32) -> (i32, i32, i32) {
    %c0_i32 = arith.constant 0 : i32
    %c0_i32_0 = arith.constant 0 : i32
    %c0_i32_1 = arith.constant 0 : i32
    return %arg0, %c0_i32, %c0_i32_0 : i32, i32, i32
  }
}

</mosaic_0001>

<llo_original>
// kernel: tpu_custom_call.1
$region0: #{tpu_custom_call.1}
  #allocation0 [shape = 'u32[]', space=smem, size = 0x4, offset = 0x4, fixed_abs, tag = 'smem constant byte address 0x4 - core index']
  #allocation1 [shape = 'u32[144,128]{1,0:T(1,128)}', space=vmem, size = 0x12000, scoped, tag = 'internal scratch']
  %s0 = inlined_call_operand.hbm [shape: f32[1,64,64], index: 0, kind: input, shape index: {}]
  %s1 = inlined_call_operand.vmem [shape: bf16[1,64,8], index: 1, kind: input, shape index: {}]
  %s2 = inlined_call_operand.vmem [shape: bf16[8,32], index: 2, kind: input, shape index: {}]
  %s3 = inlined_call_operand.vmem [shape: f32[1,32], index: 3, kind: input, shape index: {}]
  %s4 = inlined_call_operand.vmem [shape: bf16[32,128], index: 4, kind: input, shape index: {}]
  %s5 = inlined_call_operand.vmem [shape: f32[1,128], index: 5, kind: input, shape index: {}]
  %s6 = inlined_call_operand.hbm [shape: f32[1,64,128], index: 6, kind: output, shape index: {}]
  %s7 = sld [smem:[#allocation0]]
  $region38: #{tpu_custom_call.1} parent=0
    _
  %s9 = ssub.s32 1, %s7
  %s10 = scalar_select 0, %s9, %s7
  $region1: #{tpu_custom_call.1} parent=0
    #allocation2 [shape = 'u8[32768]{0}', space=vmem, size = 0x8000, scoped, tag = 'input window, operand 0, single buffered']
    #allocation3 [shape = 's32[1]{0}', space=sflag, size = 0x4, scoped, tag = 'scoped memory for tpu_custom_call.1']
    #allocation4 [shape = 's32[1]{0}', space=sflag, size = 0x4, scoped, tag = 'scoped memory for tpu_custom_call.1']
    #allocation5 [shape = 'u8[32768]{0}', space=vmem, size = 0x8000, scoped, tag = 'output window, operand 0, single buffered']
    %11 = vsyncpa [#allocation3], 0
    %12 = vsyncpa [#allocation4], 0
    // Predicated region
    $region2: #{tpu_custom_call.1} parent=1 // pred_check
      _
    $region3: #{tpu_custom_call.1} parent=1 // pred_check_branch
      %14 = sbr.rel (0) target = $region5
    $region4: #{tpu_custom_call.1} parent=1 // pred_region
      %s16 = ssub.s32 1024, 1024
      %17 = vsyncadd [#allocation3], %s16
      %s18 = sshll.u32 [#allocation2], 4
      %s19 = int_to_ptr.vmem [resolvable:$true] %s18
      %24 = dma.hbm_to_vmem [thread:$0]  %s0, 1024, %s19, [#allocation3], 128, 128, 8
    $region5: #{tpu_custom_call.1} parent=1 // pred_fallthru
      _
    // Predicated region
    $region6: #{tpu_custom_call.1} parent=1 // pred_check
      _
    $region7: #{tpu_custom_call.1} parent=1 // pred_check_branch
      %26 = sbr.rel (0) target = $region9
    $region8: #{tpu_custom_call.1} parent=1 // pred_region
      _
    $region9: #{tpu_custom_call.1} parent=1 // pred_fallthru
      _
    // Predicated region
    $region10: #{tpu_custom_call.1} parent=1 // pred_check
      _
    $region11: #{tpu_custom_call.1} parent=1 // pred_check_branch
      %28 = sbr.rel (0) target = $region13
    $region12: #{tpu_custom_call.1} parent=1 // pred_region
      _
    $region13: #{tpu_custom_call.1} parent=1 // pred_fallthru
      _
    // Predicated region
    $region14: #{tpu_custom_call.1} parent=1 // pred_check
      _
    $region15: #{tpu_custom_call.1} parent=1 // pred_check_branch
      %30 = sbr.rel (0) target = $region17
    $region16: #{tpu_custom_call.1} parent=1 // pred_region
      _
    $region17: #{tpu_custom_call.1} parent=1 // pred_fallthru
      _
    // Predicated region
    $region18: #{tpu_custom_call.1} parent=1 // pred_check
      _
    $region19: #{tpu_custom_call.1} parent=1 // pred_check_branch
      %32 = sbr.rel (0) target = $region21
    $region20: #{tpu_custom_call.1} parent=1 // pred_region
      _
    $region21: #{tpu_custom_call.1} parent=1 // pred_fallthru
      _
    // Predicated region
    $region22: #{tpu_custom_call.1} parent=1 // pred_check
      _
    $region23: #{tpu_custom_call.1} parent=1 // pred_check_branch
      %34 = sbr.rel (0) target = $region25
    $region24: #{tpu_custom_call.1} parent=1 // pred_region
      _
    $region25: #{tpu_custom_call.1} parent=1 // pred_fallthru
      _
    // Predicated region
    $region26: #{tpu_custom_call.1} parent=1 // pred_check
      _
    $region27: #{tpu_custom_call.1} parent=1 // pred_check_branch
      %36 = sbr.rel (0) target = $region29
    $region28: #{tpu_custom_call.1} parent=1 // pred_region
      %37 = dma.done [#allocation3], 1024
    $region29: #{tpu_custom_call.1} parent=1 // pred_fallthru
      _
    %v39 = vld [vmem:[#allocation2] sm:$0xff]
    %v40 = vld [vmem:[#allocation2 + $0x8] sm:$0xff]
    %v41 = vld [vmem:[#allocation2 + $0x10] sm:$0xff]
    %v42 = vld [vmem:[#allocation2 + $0x18] sm:$0xff]
    %v43 = vld [vmem:[#allocation2 + $0x20] sm:$0xff]
    %v44 = vld [vmem:[#allocation2 + $0x28] sm:$0xff]
    %v45 = vld [vmem:[#allocation2 + $0x30] sm:$0xff]
    %v46 = vld [vmem:[#allocation2 + $0x38] sm:$0xff]
    %v47 = vld [vmem:[%s1] sm:$0xf]
    %v48 = vld [vmem:[%s1 + $0x4] sm:$0xf]
    %v49 = vld [vmem:[%s1 + $0x8] sm:$0xf]
    %v50 = vld [vmem:[%s1 + $0xc] sm:$0xf]
    %v51 = vld [vmem:[%s1 + $0x10] sm:$0xf]
    %v52 = vld [vmem:[%s1 + $0x14] sm:$0xf]
    %v53 = vld [vmem:[%s1 + $0x18] sm:$0xf]
    %v54 = vld [vmem:[%s1 + $0x1c] sm:$0xf]
    %v55 = vld [vmem:[%s2] sm:$0xf]
    %v64 = vunpack.c.l.b16 %v47
    %v65 = vunpack.c.l.b16 %v48
    %v66 = vunpack.c.l.b16 %v49
    %v67 = vunpack.c.l.b16 %v50
    %v68 = vunpack.c.l.b16 %v51
    %v69 = vunpack.c.l.b16 %v52
    %v70 = vunpack.c.l.b16 %v53
    %v71 = vunpack.c.l.b16 %v54
    %v72 = vpack.c.b16 %v65, %v64
    %v73 = vpack.c.b16 %v67, %v66
    %v74 = vpack.c.b16 %v69, %v68
    %v75 = vpack.c.b16 %v71, %v70
    %vm76 = vcmask 64512
    %v78 = vsel %vm76, %v72, 0
    %v81 = vsel %vm76, %v73, 0
    %v84 = vsel %vm76, %v74, 0
    %v87 = vsel %vm76, %v75, 0
    %vm89 = vcmask 1043456
    %v91 = vsel %vm89, %v55, 0
    %93 = vmatprep.subr.bf16.mxu0 0
    %94 = vmatpush1.bf16.msra.mxu0 0
    %95 = vmatprep.subr.bf16.mxu0 0
    %96 = vmatpush1.bf16.msra.mxu0 0
    %97 = vmatprep.subr.bf16.mxu0 0
    %98 = vmatpush1.bf16.msra.mxu0 0
    %99 = vmatprep.subr.bf16.mxu0 0
    %100 = vmatpush1.bf16.msra.mxu0 0
    %101 = vmatprep.subr.bf16.mxu0 0
    %102 = vmatpush1.bf16.msra.mxu0 0
    %103 = vmatprep.subr.bf16.mxu0 0
    %104 = vmatpush1.bf16.msra.mxu0 0
    %105 = vmatprep.subr.bf16.mxu0 0
    %106 = vmatpush1.bf16.msra.mxu0 0
    %107 = vmatprep.subr.bf16.mxu0 0
    %108 = vmatpush1.bf16.msra.mxu0 %v91
    %109 = vmatprep.subr.bf16.mxu0 0
    %110 = vmatpush2.bf16.msra.mxu0 0
    %111 = vmatprep.subr.bf16.mxu0 0
    %112 = vmatpush2.bf16.msra.mxu0 0
    %113 = vmatprep.subr.bf16.mxu0 0
    %114 = vmatpush2.bf16.msra.mxu0 0
    %115 = vmatprep.subr.bf16.mxu0 0
    %116 = vmatpush2.bf16.msra.mxu0 0
    %117 = vmatprep.subr.bf16.mxu0 0
    %118 = vmatpush2.bf16.msra.mxu0 0
    %119 = vmatprep.subr.bf16.mxu0 0
    %120 = vmatpush2.bf16.msra.mxu0 0
    %121 = vmatprep.subr.bf16.mxu0 0
    %122 = vmatpush2.bf16.msra.mxu0 0
    %123 = vmatprep.subr.bf16.mxu0 0
    %124 = vmatpush2.bf16.msra.mxu0 0
    %125 = vmatprep.mubr.bf16.mxu0 0
    %126 = vmatmul.mubr.bf16.gmra.mxu0 %v78
    %v127 = vpop.f32.mrf.mxu0
    %v128 = vadd.f32 0.0, %v127
    %v129 = vpop.f32.mrf.mxu0
    %v130 = vpop.f32.mrf.mxu0
    %v131 = vadd.f32 0.0, %v130
    %v132 = vpop.f32.mrf.mxu0
    %133 = vmatprep.mubr.bf16.mxu0 0
    %134 = vmatmul.mubr.bf16.gmra.mxu0 %v81
    %v135 = vpop.f32.mrf.mxu0
    %v136 = vadd.f32 0.0, %v135
    %v137 = vpop.f32.mrf.mxu0
    %v138 = vpop.f32.mrf.mxu0
    %v139 = vadd.f32 0.0, %v138
    %v140 = vpop.f32.mrf.mxu0
    %141 = vmatprep.mubr.bf16.mxu0 0
    %142 = vmatmul.mubr.bf16.gmra.mxu0 %v84
    %v143 = vpop.f32.mrf.mxu0
    %v144 = vadd.f32 0.0, %v143
    %v145 = vpop.f32.mrf.mxu0
    %v146 = vpop.f32.mrf.mxu0
    %v147 = vadd.f32 0.0, %v146
    %v148 = vpop.f32.mrf.mxu0
    %149 = vmatprep.mubr.bf16.mxu0 0
    %150 = vmatmul.mubr.bf16.gmra.mxu0 %v87
    %v151 = vpop.f32.mrf.mxu0
    %v152 = vadd.f32 0.0, %v151
    %v153 = vpop.f32.mrf.mxu0
    %v154 = vpop.f32.mrf.mxu0
    %v155 = vadd.f32 0.0, %v154
    %v156 = vpop.f32.mrf.mxu0
    %157 = vdwg.mxu0
    %v158 = vld [vmem:[%s3] sm:$0x1]
    %v160 = vlaneseq
    %v161 = vshrl.u32 %v160, 7
    %v162 = vsub.s32 0, %v161
    %v163 = vrot.slane %v158, %v162
    %vm165 = vcmask 523264
    %v167 = vsel %vm165, %v39, 0
    %v170 = vsel %vm165, %v40, 0
    %v173 = vsel %vm165, %v41, 0
    %v176 = vsel %vm165, %v42, 0
    %v179 = vsel %vm165, %v43, 0
    %v182 = vsel %vm165, %v44, 0
    %v185 = vsel %vm165, %v45, 0
    %v188 = vsel %vm165, %v46, 0
    %190 = vmatprep.subr.mxu0 0.0
    %191 = vmatpush1.msra.mxu0 0.0
    %192 = vmatprep.subr.mxu0 0.0
    %193 = vmatpush1.msra.mxu0 0.0
    %194 = vmatprep.subr.mxu0 0.0
    %195 = vmatpush1.msra.mxu0 0.0
    %196 = vmatprep.subr.mxu0 0.0
    %197 = vmatpush1.msra.mxu0 0.0
    %198 = vmatprep.subr.mxu0 0.0
    %199 = vmatpush1.msra.mxu0 0.0
    %200 = vmatprep.subr.mxu0 0.0
    %201 = vmatpush1.msra.mxu0 0.0
    %202 = vmatprep.subr.mxu0 0.0
    %203 = vmatpush1.msra.mxu0 0.0
    %204 = vmatprep.subr.mxu0 0.0
    %205 = vmatpush1.msra.mxu0 0.0
    %206 = vmatprep.subr.mxu0 0.0
    %207 = vmatpush1.msra.mxu0 %v155
    %208 = vmatprep.subr.mxu0 0.0
    %209 = vmatpush1.msra.mxu0 %v152
    %210 = vmatprep.subr.mxu0 0.0
    %211 = vmatpush1.msra.mxu0 %v147
    %212 = vmatprep.subr.mxu0 0.0
    %213 = vmatpush1.msra.mxu0 %v144
    %214 = vmatprep.subr.mxu0 0.0
    %215 = vmatpush1.msra.mxu0 %v139
    %216 = vmatprep.subr.mxu0 0.0
    %217 = vmatpush1.msra.mxu0 %v136
    %218 = vmatprep.subr.mxu0 0.0
    %219 = vmatpush1.msra.mxu0 %v131
    %220 = vmatprep.subr.mxu0 0.0
    %221 = vmatpush1.msra.mxu0 %v128
    %222 = vmatprep.subr.mxu0 0.0
    %223 = vmatpush2.msra.mxu0 0.0
    %224 = vmatprep.subr.mxu0 0.0
    %225 = vmatpush2.msra.mxu0 0.0
    %226 = vmatprep.subr.mxu0 0.0
    %227 = vmatpush2.msra.mxu0 0.0
    %228 = vmatprep.subr.mxu0 0.0
    %229 = vmatpush2.msra.mxu0 0.0
    %230 = vmatprep.subr.mxu0 0.0
    %231 = vmatpush2.msra.mxu0 0.0
    %232 = vmatprep.subr.mxu0 0.0
    %233 = vmatpush2.msra.mxu0 0.0
    %234 = vmatprep.subr.mxu0 0.0
    %235 = vmatpush2.msra.mxu0 0.0
    %236 = vmatprep.subr.mxu0 0.0
    %237 = vmatpush2.msra.mxu0 0.0
    %238 = vmatprep.subr.mxu0 0.0
    %239 = vmatpush2.msra.mxu0 0.0
    %240 = vmatprep.subr.mxu0 0.0
    %241 = vmatpush2.msra.mxu0 0.0
    %242 = vmatprep.subr.mxu0 0.0
    %243 = vmatpush2.msra.mxu0 0.0
    %244 = vmatprep.subr.mxu0 0.0
    %245 = vmatpush2.msra.mxu0 0.0
    %246 = vmatprep.subr.mxu0 0.0
    %247 = vmatpush2.msra.mxu0 0.0
    %248 = vmatprep.subr.mxu0 0.0
    %249 = vmatpush2.msra.mxu0 0.0
    %250 = vmatprep.subr.mxu0 0.0
    %251 = vmatpush2.msra.mxu0 0.0
    %252 = vmatprep.subr.mxu0 0.0
    %253 = vmatpush2.msra.mxu0 0.0
    %254 = vmatprep.mubr.f32.mxu0 0.0
    %255 = vmatmul.mubr.f32.gmra.mxu0 %v167
    %v256 = vpop.f32.mrf.mxu0
    %v257 = vadd.f32 %v163, %v256
    %v258 = vpop.f32.mrf.mxu0
    %259 = vmatprep.mubr.f32.mxu0 0.0
    %260 = vmatmul.mubr.f32.gmra.mxu0 %v170
    %v261 = vpop.f32.mrf.mxu0
    %v262 = vadd.f32 %v163, %v261
    %v263 = vpop.f32.mrf.mxu0
    %264 = vmatprep.mubr.f32.mxu0 0.0
    %265 = vmatmul.mubr.f32.gmra.mxu0 %v173
    %v266 = vpop.f32.mrf.mxu0
    %v267 = vadd.f32 %v163, %v266
    %v268 = vpop.f32.mrf.mxu0
    %269 = vmatprep.mubr.f32.mxu0 0.0
    %270 = vmatmul.mubr.f32.gmra.mxu0 %v176
    %v271 = vpop.f32.mrf.mxu0
    %v272 = vadd.f32 %v163, %v271
    %v273 = vpop.f32.mrf.mxu0
    %274 = vmatprep.mubr.f32.mxu0 0.0
    %275 = vmatmul.mubr.f32.gmra.mxu0 %v179
    %v276 = vpop.f32.mrf.mxu0
    %v277 = vadd.f32 %v163, %v276
    %v278 = vpop.f32.mrf.mxu0
    %279 = vmatprep.mubr.f32.mxu0 0.0
    %280 = vmatmul.mubr.f32.gmra.mxu0 %v182
    %v281 = vpop.f32.mrf.mxu0
    %v282 = vadd.f32 %v163, %v281
    %v283 = vpop.f32.mrf.mxu0
    %284 = vmatprep.mubr.f32.mxu0 0.0
    %285 = vmatmul.mubr.f32.gmra.mxu0 %v185
    %v286 = vpop.f32.mrf.mxu0
    %v287 = vadd.f32 %v163, %v286
    %v288 = vpop.f32.mrf.mxu0
    %289 = vmatprep.mubr.f32.mxu0 0.0
    %290 = vmatmul.mubr.f32.gmra.mxu0 %v188
    %v291 = vpop.f32.mrf.mxu0
    %v292 = vadd.f32 %v163, %v291
    %v293 = vpop.f32.mrf.mxu0
    %294 = vdwg.mxu0
    %v295 = vmax.f32 %v257, 0.0
    %v296 = vmax.f32 %v262, 0.0
    %v297 = vmax.f32 %v267, 0.0
    %v298 = vmax.f32 %v272, 0.0
    %v299 = vmax.f32 %v277, 0.0
    %v300 = vmax.f32 %v282, 0.0
    %v301 = vmax.f32 %v287, 0.0
    %v302 = vmax.f32 %v292, 0.0
    %v303 = vpack.c.bf16 %v296, %v295
    %v304 = vpack.c.bf16 %v298, %v297
    %v305 = vpack.c.bf16 %v300, %v299
    %v306 = vpack.c.bf16 %v302, %v301
    %v307 = vld [vmem:[%s4] sm:$0xf]
    %v308 = vld [vmem:[%s4 + $0x4] sm:$0xf]
    %v309 = vld [vmem:[%s4 + $0x8] sm:$0xf]
    %v310 = vld [vmem:[%s4 + $0xc] sm:$0xf]
    %v315 = vunpack.c.l.b16 %v307
    %v316 = vunpack.c.l.b16 %v308
    %v317 = vunpack.c.l.b16 %v309
    %v318 = vunpack.c.l.b16 %v310
    %v319 = vpack.c.b16 %v316, %v315
    %v320 = vpack.c.b16 %v318, %v317
    %vm323 = vcmask 261120
    %v325 = vsel %vm323, %v303, 0
    %v328 = vsel %vm323, %v304, 0
    %v331 = vsel %vm323, %v305, 0
    %v334 = vsel %vm323, %v306, 0
    %336 = vmatprep.subr.bf16.mxu0 0
    %337 = vmatpush1.bf16.msra.mxu0 0
    %338 = vmatprep.subr.bf16.mxu0 0
    %339 = vmatpush1.bf16.msra.mxu0 0
    %340 = vmatprep.subr.bf16.mxu0 0
    %341 = vmatpush1.bf16.msra.mxu0 0
    %342 = vmatprep.subr.bf16.mxu0 0
    %343 = vmatpush1.bf16.msra.mxu0 0
    %344 = vmatprep.subr.bf16.mxu0 0
    %345 = vmatpush1.bf16.msra.mxu0 0
    %346 = vmatprep.subr.bf16.mxu0 0
    %347 = vmatpush1.bf16.msra.mxu0 0
    %348 = vmatprep.subr.bf16.mxu0 0
    %349 = vmatpush1.bf16.msra.mxu0 %v320
    %350 = vmatprep.subr.bf16.mxu0 0
    %351 = vmatpush1.bf16.msra.mxu0 %v319
    %352 = vmatprep.subr.bf16.mxu0 0
    %353 = vmatpush2.bf16.msra.mxu0 0
    %354 = vmatprep.subr.bf16.mxu0 0
    %355 = vmatpush2.bf16.msra.mxu0 0
    %356 = vmatprep.subr.bf16.mxu0 0
    %357 = vmatpush2.bf16.msra.mxu0 0
    %358 = vmatprep.subr.bf16.mxu0 0
    %359 = vmatpush2.bf16.msra.mxu0 0
    %360 = vmatprep.subr.bf16.mxu0 0
    %361 = vmatpush2.bf16.msra.mxu0 0
    %362 = vmatprep.subr.bf16.mxu0 0
    %363 = vmatpush2.bf16.msra.mxu0 0
    %364 = vmatprep.subr.bf16.mxu0 0
    %365 = vmatpush2.bf16.msra.mxu0 0
    %366 = vmatprep.subr.bf16.mxu0 0
    %367 = vmatpush2.bf16.msra.mxu0 0
    %368 = vmatprep.mubr.bf16.mxu0 0
    %369 = vmatmul.mubr.bf16.gmra.mxu0 %v325
    %v370 = vpop.f32.mrf.mxu0
    %v371 = vadd.f32 0.0, %v370
    %v372 = vpop.f32.mrf.mxu0
    %v373 = vpop.f32.mrf.mxu0
    %v374 = vadd.f32 0.0, %v373
    %v375 = vpop.f32.mrf.mxu0
    %376 = vmatprep.mubr.bf16.mxu0 0
    %377 = vmatmul.mubr.bf16.gmra.mxu0 %v328
    %v378 = vpop.f32.mrf.mxu0
    %v379 = vadd.f32 0.0, %v378
    %v380 = vpop.f32.mrf.mxu0
    %v381 = vpop.f32.mrf.mxu0
    %v382 = vadd.f32 0.0, %v381
    %v383 = vpop.f32.mrf.mxu0
    %384 = vmatprep.mubr.bf16.mxu0 0
    %385 = vmatmul.mubr.bf16.gmra.mxu0 %v331
    %v386 = vpop.f32.mrf.mxu0
    %v387 = vadd.f32 0.0, %v386
    %v388 = vpop.f32.mrf.mxu0
    %v389 = vpop.f32.mrf.mxu0
    %v390 = vadd.f32 0.0, %v389
    %v391 = vpop.f32.mrf.mxu0
    %392 = vmatprep.mubr.bf16.mxu0 0
    %393 = vmatmul.mubr.bf16.gmra.mxu0 %v334
    %v394 = vpop.f32.mrf.mxu0
    %v395 = vadd.f32 0.0, %v394
    %v396 = vpop.f32.mrf.mxu0
    %v397 = vpop.f32.mrf.mxu0
    %v398 = vadd.f32 0.0, %v397
    %v399 = vpop.f32.mrf.mxu0
    %400 = vdwg.mxu0
    %v401 = vld [vmem:[%s5] sm:$0x1]
    %v403 = vlaneseq
    %v404 = vshrl.u32 %v403, 7
    %v405 = vsub.s32 0, %v404
    %v406 = vrot.slane %v401, %v405
    %408 = vmatprep.subr.mxu0 0.0
    %409 = vmatpush1.msra.mxu0 0.0
    %410 = vmatprep.subr.mxu0 0.0
    %411 = vmatpush1.msra.mxu0 0.0
    %412 = vmatprep.subr.mxu0 0.0
    %413 = vmatpush1.msra.mxu0 0.0
    %414 = vmatprep.subr.mxu0 0.0
    %415 = vmatpush1.msra.mxu0 0.0
    %416 = vmatprep.subr.mxu0 0.0
    %417 = vmatpush1.msra.mxu0 0.0
    %418 = vmatprep.subr.mxu0 0.0
    %419 = vmatpush1.msra.mxu0 0.0
    %420 = vmatprep.subr.mxu0 0.0
    %421 = vmatpush1.msra.mxu0 0.0
    %422 = vmatprep.subr.mxu0 0.0
    %423 = vmatpush1.msra.mxu0 0.0
    %424 = vmatprep.subr.mxu0 0.0
    %425 = vmatpush1.msra.mxu0 %v398
    %426 = vmatprep.subr.mxu0 0.0
    %427 = vmatpush1.msra.mxu0 %v395
    %428 = vmatprep.subr.mxu0 0.0
    %429 = vmatpush1.msra.mxu0 %v390
    %430 = vmatprep.subr.mxu0 0.0
    %431 = vmatpush1.msra.mxu0 %v387
    %432 = vmatprep.subr.mxu0 0.0
    %433 = vmatpush1.msra.mxu0 %v382
    %434 = vmatprep.subr.mxu0 0.0
    %435 = vmatpush1.msra.mxu0 %v379
    %436 = vmatprep.subr.mxu0 0.0
    %437 = vmatpush1.msra.mxu0 %v374
    %438 = vmatprep.subr.mxu0 0.0
    %439 = vmatpush1.msra.mxu0 %v371
    %440 = vmatprep.subr.mxu0 0.0
    %441 = vmatpush2.msra.mxu0 0.0
    %442 = vmatprep.subr.mxu0 0.0
    %443 = vmatpush2.msra.mxu0 0.0
    %444 = vmatprep.subr.mxu0 0.0
    %445 = vmatpush2.msra.mxu0 0.0
    %446 = vmatprep.subr.mxu0 0.0
    %447 = vmatpush2.msra.mxu0 0.0
    %448 = vmatprep.subr.mxu0 0.0
    %449 = vmatpush2.msra.mxu0 0.0
    %450 = vmatprep.subr.mxu0 0.0
    %451 = vmatpush2.msra.mxu0 0.0
    %452 = vmatprep.subr.mxu0 0.0
    %453 = vmatpush2.msra.mxu0 0.0
    %454 = vmatprep.subr.mxu0 0.0
    %455 = vmatpush2.msra.mxu0 0.0
    %456 = vmatprep.subr.mxu0 0.0
    %457 = vmatpush2.msra.mxu0 0.0
    %458 = vmatprep.subr.mxu0 0.0
    %459 = vmatpush2.msra.mxu0 0.0
    %460 = vmatprep.subr.mxu0 0.0
    %461 = vmatpush2.msra.mxu0 0.0
    %462 = vmatprep.subr.mxu0 0.0
    %463 = vmatpush2.msra.mxu0 0.0
    %464 = vmatprep.subr.mxu0 0.0
    %465 = vmatpush2.msra.mxu0 0.0
    %466 = vmatprep.subr.mxu0 0.0
    %467 = vmatpush2.msra.mxu0 0.0
    %468 = vmatprep.subr.mxu0 0.0
    %469 = vmatpush2.msra.mxu0 0.0
    %470 = vmatprep.subr.mxu0 0.0
    %471 = vmatpush2.msra.mxu0 0.0
    %472 = vmatprep.mubr.f32.mxu0 0.0
    %473 = vmatmul.mubr.f32.gmra.mxu0 %v167
    %v474 = vpop.f32.mrf.mxu0
    %v475 = vadd.f32 %v406, %v474
    %v476 = vpop.f32.mrf.mxu0
    %477 = vmatprep.mubr.f32.mxu0 0.0
    %478 = vmatmul.mubr.f32.gmra.mxu0 %v170
    %v479 = vpop.f32.mrf.mxu0
    %v480 = vadd.f32 %v406, %v479
    %v481 = vpop.f32.mrf.mxu0
    %482 = vmatprep.mubr.f32.mxu0 0.0
    %483 = vmatmul.mubr.f32.gmra.mxu0 %v173
    %v484 = vpop.f32.mrf.mxu0
    %v485 = vadd.f32 %v406, %v484
    %v486 = vpop.f32.mrf.mxu0
    %487 = vmatprep.mubr.f32.mxu0 0.0
    %488 = vmatmul.mubr.f32.gmra.mxu0 %v176
    %v489 = vpop.f32.mrf.mxu0
    %v490 = vadd.f32 %v406, %v489
    %v491 = vpop.f32.mrf.mxu0
    %492 = vmatprep.mubr.f32.mxu0 0.0
    %493 = vmatmul.mubr.f32.gmra.mxu0 %v179
    %v494 = vpop.f32.mrf.mxu0
    %v495 = vadd.f32 %v406, %v494
    %v496 = vpop.f32.mrf.mxu0
    %497 = vmatprep.mubr.f32.mxu0 0.0
    %498 = vmatmul.mubr.f32.gmra.mxu0 %v182
    %v499 = vpop.f32.mrf.mxu0
    %v500 = vadd.f32 %v406, %v499
    %v501 = vpop.f32.mrf.mxu0
    %502 = vmatprep.mubr.f32.mxu0 0.0
    %503 = vmatmul.mubr.f32.gmra.mxu0 %v185
    %v504 = vpop.f32.mrf.mxu0
    %v505 = vadd.f32 %v406, %v504
    %v506 = vpop.f32.mrf.mxu0
    %507 = vmatprep.mubr.f32.mxu0 0.0
    %508 = vmatmul.mubr.f32.gmra.mxu0 %v188
    %v509 = vpop.f32.mrf.mxu0
    %v510 = vadd.f32 %v406, %v509
    %v511 = vpop.f32.mrf.mxu0
    %512 = vdwg.mxu0
    %513 = vmax.xlane.f32.xlu0 %v475
    %v514 = vpop.xlane.xlu0 %513
    %515 = vmax.xlane.f32.xlu0 %v480
    %v516 = vpop.xlane.xlu0 %515
    %517 = vmax.xlane.f32.xlu0 %v485
    %v518 = vpop.xlane.xlu0 %517
    %519 = vmax.xlane.f32.xlu0 %v490
    %v520 = vpop.xlane.xlu0 %519
    %521 = vmax.xlane.f32.xlu0 %v495
    %v522 = vpop.xlane.xlu0 %521
    %523 = vmax.xlane.f32.xlu0 %v500
    %v524 = vpop.xlane.xlu0 %523
    %525 = vmax.xlane.f32.xlu0 %v505
    %v526 = vpop.xlane.xlu0 %525
    %527 = vmax.xlane.f32.xlu0 %v510
    %v528 = vpop.xlane.xlu0 %527
    %v529 = vsub.f32 %v475, %v514
    %v530 = vsub.f32 %v480, %v516
    %v531 = vsub.f32 %v485, %v518
    %v532 = vsub.f32 %v490, %v520
    %v533 = vsub.f32 %v495, %v522
    %v534 = vsub.f32 %v500, %v524
    %v535 = vsub.f32 %v505, %v526
    %v536 = vsub.f32 %v510, %v528
    %v537 = vmul.f32 %v529, 1.442695
    %v538 = vpow.pop %v537
    %v539 = vmul.f32 %v530, 1.442695
    %v540 = vpow.pop %v539
    %v541 = vmul.f32 %v531, 1.442695
    %v542 = vpow.pop %v541
    %v543 = vmul.f32 %v532, 1.442695
    %v544 = vpow.pop %v543
    %v545 = vmul.f32 %v533, 1.442695
    %v546 = vpow.pop %v545
    %v547 = vmul.f32 %v534, 1.442695
    %v548 = vpow.pop %v547
    %v549 = vmul.f32 %v535, 1.442695
    %v550 = vpow.pop %v549
    %v551 = vmul.f32 %v536, 1.442695
    %v552 = vpow.pop %v551
    %553 = vadd.xlane.f32.xlu0 %v538
    %v554 = vpop.xlane.xlu0 %553
    %555 = vadd.xlane.f32.xlu0 %v540
    %v556 = vpop.xlane.xlu0 %555
    %557 = vadd.xlane.f32.xlu0 %v542
    %v558 = vpop.xlane.xlu0 %557
    %559 = vadd.xlane.f32.xlu0 %v544
    %v560 = vpop.xlane.xlu0 %559
    %561 = vadd.xlane.f32.xlu0 %v546
    %v562 = vpop.xlane.xlu0 %561
    %563 = vadd.xlane.f32.xlu0 %v548
    %v564 = vpop.xlane.xlu0 %563
    %565 = vadd.xlane.f32.xlu0 %v550
    %v566 = vpop.xlane.xlu0 %565
    %567 = vadd.xlane.f32.xlu0 %v552
    %v568 = vpop.xlane.xlu0 %567
    %v569 = vlog2.pop %v554
    %v570 = vmul.f32 %v569, 0.6931472
    %v571 = vlog2.pop %v556
    %v572 = vmul.f32 %v571, 0.6931472
    %v573 = vlog2.pop %v558
    %v574 = vmul.f32 %v573, 0.6931472
    %v575 = vlog2.pop %v560
    %v576 = vmul.f32 %v575, 0.6931472
    %v577 = vlog2.pop %v562
    %v578 = vmul.f32 %v577, 0.6931472
    %v579 = vlog2.pop %v564
    %v580 = vmul.f32 %v579, 0.6931472
    %v581 = vlog2.pop %v566
    %v582 = vmul.f32 %v581, 0.6931472
    %v583 = vlog2.pop %v568
    %v584 = vmul.f32 %v583, 0.6931472
    %v585 = vsub.f32 %v529, %v570
    %v586 = vsub.f32 %v530, %v572
    %v587 = vsub.f32 %v531, %v574
    %v588 = vsub.f32 %v532, %v576
    %v589 = vsub.f32 %v533, %v578
    %v590 = vsub.f32 %v534, %v580
    %v591 = vsub.f32 %v535, %v582
    %v592 = vsub.f32 %v536, %v584
    %593 = vst [vmem:[#allocation5] sm:$0xff] %v585
    %594 = vst [vmem:[#allocation5 + $0x8] sm:$0xff] %v586
    %595 = vst [vmem:[#allocation5 + $0x10] sm:$0xff] %v587
    %596 = vst [vmem:[#allocation5 + $0x18] sm:$0xff] %v588
    %597 = vst [vmem:[#allocation5 + $0x20] sm:$0xff] %v589
    %598 = vst [vmem:[#allocation5 + $0x28] sm:$0xff] %v590
    %599 = vst [vmem:[#allocation5 + $0x30] sm:$0xff] %v591
    %600 = vst [vmem:[#allocation5 + $0x38] sm:$0xff] %v592
    // Predicated region
    $region30: #{tpu_custom_call.1} parent=1 // pred_check
      _
    $region31: #{tpu_custom_call.1} parent=1 // pred_check_branch
      %602 = sbr.rel (0) target = $region33
    $region32: #{tpu_custom_call.1} parent=1 // pred_region
      %s604 = ssub.s32 1024, 1024
      %605 = vsyncadd [#allocation4], %s604
      %s606 = sshll.u32 [#allocation5], 4
      %s607 = int_to_ptr.vmem [resolvable:$true] %s606
      %612 = dma.vmem_to_hbm [thread:$0]  %s607, 1024, %s6, [#allocation4], 128, 128, 8
    $region33: #{tpu_custom_call.1} parent=1 // pred_fallthru
      _
    // Predicated region
    $region34: #{tpu_custom_call.1} parent=1 // pred_check
      _
    $region35: #{tpu_custom_call.1} parent=1 // pred_check_branch
      %614 = sbr.rel (0) target = $region37
    $region36: #{tpu_custom_call.1} parent=1 // pred_region
      %615 = dma.done [#allocation4], 1024
    $region37: #{tpu_custom_call.1} parent=1 // pred_fallthru
      _
    %616 = vsyncpa [#allocation3], 1
    %617 = vsyncpa [#allocation4], 1

</llo_original>
